<compile_context>
chip_gen: v7x
topology: tpu7x:2x2x1
jax: 0.10.0
libtpu: 0.0.40
codegen_flags: <defaults>
</compile_context>

<pallas_src>
import functools

import numpy as np
import jax
import jax.numpy as jnp
from jax import lax
from jax.experimental import pallas as pl
from jax.experimental.pallas import tpu as pltpu

_LANES = 128


def _softmax_sample_kernel(x_ref, u_ref, expand_ref, collect_ref,
                           act_ref, probs_ref, *, T, A):
    # x_ref: (TR, 128) -- each 128-lane row packs G = 128 // A batch rows of A actions.
    x = x_ref[...].astype(jnp.float32) * T
    TR, L = x.shape

    # lane position within its A-wide action group (A is a power of two)
    q = lax.broadcasted_iota(jnp.int32, (TR, L), 1) & (A - 1)

    shifts = []
    s = 1
    while s < A:
        shifts.append(s)
        s *= 2
    # hoisted per-step lane masks, shared across the butterflies below
    fwd_in_group = [q < (A - s) for s in shifts]   # lane l+s stays inside the same group
    bwd_in_group = [q >= s for s in shifts]        # lane l-s stays inside the same group

    # ---- segmented max over each A-lane group (wrap-around butterfly, XLU rolls) ----
    m = x
    for s, ok in zip(shifts, fwd_in_group):
        near = pltpu.roll(m, shift=L - s, axis=1)    # m[(l + s) % L]
        far = pltpu.roll(near, shift=A, axis=1)      # m[(l + s - A) % L]
        m = jnp.maximum(m, jnp.where(ok, near, far))

    e = jnp.exp(x - m)                               # group max -> exp(0) = 1, so group sum >= 1

    # ---- inclusive per-group prefix sum (Hillis-Steele scan, exact f32, XLU rolls) ----
    cdf = e
    for s, ok in zip(shifts, bwd_in_group):
        prev = pltpu.roll(cdf, shift=s, axis=1)      # cdf[(l - s) % L]
        cdf = cdf + jnp.where(ok, prev, 0.0)

    # ---- group total broadcast to every lane: suffix-max of the non-decreasing cdf ----
    ssum = cdf
    for s, ok in zip(shifts, fwd_in_group):
        nxt = pltpu.roll(ssum, shift=L - s, axis=1)  # ssum[(l + s) % L]
        ssum = jnp.where(ok, jnp.maximum(ssum, nxt), ssum)

    # ---- probs = e / ssum via EUP approx reciprocal + one Newton step (~f32 accurate) ----
    inv = pl.reciprocal(ssum, approx=True)
    inv = inv * (2.0 - ssum * inv)
    probs_ref[...] = (e * inv).astype(probs_ref.dtype)    # lane-dense (TR, 128) store

    # ---- inverse-CDF sampling (unnormalized compare: cdf < u * ssum) ----
    u_b = jnp.dot(u_ref[...], expand_ref[...],
                  precision=lax.Precision.HIGHEST,
                  preferred_element_type=jnp.float32)     # (TR, L), constant within each group
    ind = (cdf < u_b * ssum).astype(jnp.bfloat16)          # 0/1 indicators (exact in bf16)
    cnt = jnp.dot(ind, collect_ref[...], preferred_element_type=jnp.float32)   # (TR, G) counts
    act_ref[...] = jnp.minimum(cnt.astype(jnp.int32), A - 1)


@functools.lru_cache(maxsize=None)
def _group_constants(A):
    """Tiny host-built group matrices, cached per A; 0/1 entries so bf16 is exact."""
    L = _LANES
    G = L // A
    gid = np.arange(L) // A
    expand = (np.arange(G)[:, None] == gid[None, :]).astype(np.float32)   # (G, L)
    collect = expand.T                                                    # (L, G)
    return jnp.asarray(expand, jnp.float32), jnp.asarray(collect, jnp.bfloat16)


def _vmem_limit_bytes():
    try:
        cap = int(pltpu.get_tpu_info().vmem_capacity_bytes)
    except Exception:
        cap = 64 * 1024 * 1024
    # <= 96 MiB on 128-MiB chips (v5e/v6e), <= 48 MiB on 64-MiB v7x TensorCores.
    return int(min(96 * 1024 * 1024, (cap * 3) // 4))


def softmax_body(outputs, uniforms, T, *, tile_rows=4096, probs_dtype=None):
    """outputs: (B, A) float Q-values; uniforms: (B,) or (B, 1) floats in [0, 1).
    Returns (actions (B, 1) int32, probs (B, A) in probs_dtype [default: outputs.dtype])."""
    outputs = jnp.asarray(outputs)
    if not jnp.issubdtype(outputs.dtype, jnp.floating):
        outputs = outputs.astype(jnp.float32)
    if probs_dtype is None:
        probs_dtype = outputs.dtype

    B, A = outputs.shape
    L = _LANES
    # TODO(synk): pad A up to the next power of two (with very negative Q-values) for generic A.
    assert A <= L and (A & (A - 1)) == 0, "num_actions must be a power of two <= 128"
    G = L // A

    u = jnp.asarray(uniforms, jnp.float32).reshape(-1)
    assert u.shape[0] == B

    # pad the batch to a multiple of G (padded rows are independent and sliced off afterwards)
    pad = (-B) % G
    if pad:
        outputs = jnp.concatenate([outputs, jnp.zeros((pad, A), outputs.dtype)], axis=0)
        u = jnp.concatenate([u, jnp.zeros((pad,), jnp.float32)], axis=0)
    Bp = B + pad
    R = Bp // G

    x2 = outputs.reshape(R, L)          # pure view: lane-dense repack, native dtype (no up-cast)
    u2 = u.reshape(R, G)
    expand, collect = _group_constants(A)

    # Tile the batch; keep >= 2 grid steps when there is enough work (v7x megacore sharding).
    # 16-row alignment keeps bf16 and f32 blocks layout-friendly.
    TR = min(tile_rows, R)
    if TR < R:
        TR = max(16, (TR // 16) * 16)
    elif R >= 32:
        TR = max(16, (((R + 1) // 2 + 15) // 16) * 16)
    grid = (pl.cdiv(R, TR),)

    kernel = functools.partial(_softmax_sample_kernel, T=float(T), A=A)

    actions2, probs2 = pl.pallas_call(
        kernel,
        out_shape=(
            jax.ShapeDtypeStruct((R, G), jnp.int32),
            jax.ShapeDtypeStruct((R, L), probs_dtype),
        ),
        grid=grid,
        in_specs=[
            pl.BlockSpec((TR, L), lambda i: (i, 0)),
            pl.BlockSpec((TR, G), lambda i: (i, 0)),
            pl.BlockSpec((G, L), lambda i: (0, 0)),   # constant, fetched once
            pl.BlockSpec((L, G), lambda i: (0, 0)),   # constant, fetched once
        ],
        out_specs=(
            pl.BlockSpec((TR, G), lambda i: (i, 0)),
            pl.BlockSpec((TR, L), lambda i: (i, 0)),
        ),
        compiler_params=pltpu.CompilerParams(
            dimension_semantics=("parallel",),
            vmem_limit_bytes=_vmem_limit_bytes(),
        ),
    )(x2, u2, expand, collect)

    actions = actions2.reshape(Bp, 1)[:B]
    probs = probs2.reshape(Bp, A)[:B]
    return actions, probs


def _check_sampling(actions, uniforms, ref_probs, eps):
    """actions must be the inverse-CDF sample for uniforms under ref_probs (within eps)."""
    A = ref_probs.shape[1]
    ref_cdf = jnp.cumsum(ref_probs, axis=-1)
    a = actions[:, 0]
    u = uniforms[:, 0]
    hi = jnp.take_along_axis(ref_cdf, actions, axis=1)[:, 0]
    lo = jnp.where(a > 0,
                   jnp.take_along_axis(ref_cdf, jnp.maximum(actions - 1, 0), axis=1)[:, 0],
                   jnp.zeros_like(u))
    ok = (a >= 0) & (a < A) & (u > lo - eps) & ((u <= hi + eps) | (a == A - 1))
    return bool(jnp.all(ok))


if __name__ == "__main__":
    B, A = 64, 16          # batch of Q-value rows, number of actions
    T = 100.0              # softmax temperature (as in the original AI)

    key = jax.random.PRNGKey(0)
    k_x, k_u = jax.random.split(key)
    outputs = jax.random.normal(k_x, (B, A), dtype=jnp.float32)
    uniforms = jax.random.uniform(k_u, (B, 1), dtype=jnp.float32)

    # ---- f32 path: tight checks ----
    actions, probs = softmax_body(outputs, uniforms, T)
    actions = jax.block_until_ready(actions)
    probs = jax.block_until_ready(probs)

    assert actions.shape == (B, 1) and actions.dtype == jnp.int32
    assert probs.shape == (B, A) and probs.dtype == jnp.float32

    ref_probs = jax.nn.softmax(outputs * T, axis=-1)
    assert jnp.allclose(probs, ref_probs, atol=1e-5), "softmax mismatch"
    assert _check_sampling(actions, uniforms, ref_probs, 1e-4), "sampling inconsistent"

    # ---- bf16 fast path: no wrapper up-cast, bf16 probs output (mem-bound win on v5e/v6e) ----
    outputs_bf16 = outputs.astype(jnp.bfloat16)
    actions_bf, probs_bf = softmax_body(outputs_bf16, uniforms, T)
    actions_bf = jax.block_until_ready(actions_bf)
    probs_bf = jax.block_until_ready(probs_bf)

    assert actions_bf.shape == (B, 1) and actions_bf.dtype == jnp.int32
    assert probs_bf.dtype == jnp.bfloat16
    ref_probs_bf = jax.nn.softmax(outputs_bf16.astype(jnp.float32) * T, axis=-1)
    assert jnp.allclose(probs_bf.astype(jnp.float32), ref_probs_bf, atol=1e-2), "bf16 softmax mismatch"
    assert _check_sampling(actions_bf, uniforms, ref_probs_bf, 1e-3), "bf16 sampling inconsistent"

    print("KERNEL_OK")
</pallas_src>

<mosaic_0001>
module attributes {stable_mosaic.version = 11 : i64} {
  func.func @_softmax_sample_kernel(%arg0: i32, %arg1: memref<8x128xf32, #tpu.memory_space<vmem>>, %arg2: memref<8x8xf32, #tpu.memory_space<vmem>>, %arg3: memref<8x128xf32, #tpu.memory_space<vmem>>, %arg4: memref<128x8xbf16, #tpu.memory_space<vmem>>, %arg5: memref<8x8xi32, #tpu.memory_space<vmem>>, %arg6: memref<8x128xf32, #tpu.memory_space<vmem>>) attributes {dimension_semantics = [#tpu.dimension_semantics<parallel>], iteration_bounds = array<i64: 1>, scalar_prefetch = 0 : i64, scratch_operands = 0 : i64, tpu.core_type = #tpu.core_type<tc>, window_params = [{transform_indices = @transform_0, window_bounds = array<i64: 8, 128>}, {transform_indices = @transform_1, window_bounds = array<i64: 8, 8>}, {pipeline_mode = #tpu.pipeline_mode<synchronous>, transform_indices = @transform_2, window_bounds = array<i64: 8, 128>}, {pipeline_mode = #tpu.pipeline_mode<synchronous>, transform_indices = @transform_3, window_bounds = array<i64: 128, 8>}, {transform_indices = @transform_4, window_bounds = array<i64: 8, 8>}, {transform_indices = @transform_5, window_bounds = array<i64: 8, 128>}]} {
    %c0 = arith.constant 0 : index
    %c0_0 = arith.constant 0 : index
    %0 = vector.load %arg1[%c0, %c0_0] : memref<8x128xf32, #tpu.memory_space<vmem>>, vector<8x128xf32>
    %cst = arith.constant 1.000000e+02 : f32
    %1 = vector.broadcast %cst : f32 to vector<8x128xf32>
    %2 = arith.mulf %0, %1 : vector<8x128xf32>
    %3 = tpu.iota {dimensions = array<i32: 1>} : vector<8x128xi32>
    %c15_i32 = arith.constant 15 : i32
    %4 = vector.broadcast %c15_i32 : i32 to vector<8x128xi32>
    %5 = arith.andi %3, %4 : vector<8x128xi32>
    %c15_i32_1 = arith.constant 15 : i32
    %6 = vector.broadcast %c15_i32_1 : i32 to vector<8x128xi32>
    %7 = arith.cmpi slt, %5, %6 : vector<8x128xi32>
    %c14_i32 = arith.constant 14 : i32
    %8 = vector.broadcast %c14_i32 : i32 to vector<8x128xi32>
    %9 = arith.cmpi slt, %5, %8 : vector<8x128xi32>
    %c12_i32 = arith.constant 12 : i32
    %10 = vector.broadcast %c12_i32 : i32 to vector<8x128xi32>
    %11 = arith.cmpi slt, %5, %10 : vector<8x128xi32>
    %c8_i32 = arith.constant 8 : i32
    %12 = vector.broadcast %c8_i32 : i32 to vector<8x128xi32>
    %13 = arith.cmpi slt, %5, %12 : vector<8x128xi32>
    %c1_i32 = arith.constant 1 : i32
    %14 = vector.broadcast %c1_i32 : i32 to vector<8x128xi32>
    %15 = arith.cmpi sge, %5, %14 : vector<8x128xi32>
    %c2_i32 = arith.constant 2 : i32
    %16 = vector.broadcast %c2_i32 : i32 to vector<8x128xi32>
    %17 = arith.cmpi sge, %5, %16 : vector<8x128xi32>
    %c4_i32 = arith.constant 4 : i32
    %18 = vector.broadcast %c4_i32 : i32 to vector<8x128xi32>
    %19 = arith.cmpi sge, %5, %18 : vector<8x128xi32>
    %c8_i32_2 = arith.constant 8 : i32
    %20 = vector.broadcast %c8_i32_2 : i32 to vector<8x128xi32>
    %21 = arith.cmpi sge, %5, %20 : vector<8x128xi32>
    %c127_i32 = arith.constant 127 : i32
    %22 = tpu.dynamic_rotate %2 by %c127_i32 dim 1 : vector<8x128xf32>, i32 -> vector<8x128xf32>
    %c16_i32 = arith.constant 16 : i32
    %23 = tpu.dynamic_rotate %22 by %c16_i32 dim 1 : vector<8x128xf32>, i32 -> vector<8x128xf32>
    %24 = arith.select %7, %22, %23 : vector<8x128xi1>, vector<8x128xf32>
    %25 = arith.maximumf %2, %24 : vector<8x128xf32>
    %c126_i32 = arith.constant 126 : i32
    %26 = tpu.dynamic_rotate %25 by %c126_i32 dim 1 : vector<8x128xf32>, i32 -> vector<8x128xf32>
    %c16_i32_3 = arith.constant 16 : i32
    %27 = tpu.dynamic_rotate %26 by %c16_i32_3 dim 1 : vector<8x128xf32>, i32 -> vector<8x128xf32>
    %28 = arith.select %9, %26, %27 : vector<8x128xi1>, vector<8x128xf32>
    %29 = arith.maximumf %25, %28 : vector<8x128xf32>
    %c124_i32 = arith.constant 124 : i32
    %30 = tpu.dynamic_rotate %29 by %c124_i32 dim 1 : vector<8x128xf32>, i32 -> vector<8x128xf32>
    %c16_i32_4 = arith.constant 16 : i32
    %31 = tpu.dynamic_rotate %30 by %c16_i32_4 dim 1 : vector<8x128xf32>, i32 -> vector<8x128xf32>
    %32 = arith.select %11, %30, %31 : vector<8x128xi1>, vector<8x128xf32>
    %33 = arith.maximumf %29, %32 : vector<8x128xf32>
    %c120_i32 = arith.constant 120 : i32
    %34 = tpu.dynamic_rotate %33 by %c120_i32 dim 1 : vector<8x128xf32>, i32 -> vector<8x128xf32>
    %c16_i32_5 = arith.constant 16 : i32
    %35 = tpu.dynamic_rotate %34 by %c16_i32_5 dim 1 : vector<8x128xf32>, i32 -> vector<8x128xf32>
    %36 = arith.select %13, %34, %35 : vector<8x128xi1>, vector<8x128xf32>
    %37 = arith.maximumf %33, %36 : vector<8x128xf32>
    %38 = arith.subf %2, %37 : vector<8x128xf32>
    %39 = math.exp %38 : vector<8x128xf32>
    %c1_i32_6 = arith.constant 1 : i32
    %40 = tpu.dynamic_rotate %39 by %c1_i32_6 dim 1 : vector<8x128xf32>, i32 -> vector<8x128xf32>
    %cst_7 = arith.constant 0.000000e+00 : f32
    %41 = vector.broadcast %cst_7 : f32 to vector<8x128xf32>
    %42 = arith.select %15, %40, %41 : vector<8x128xi1>, vector<8x128xf32>
    %43 = arith.addf %39, %42 : vector<8x128xf32>
    %c2_i32_8 = arith.constant 2 : i32
    %44 = tpu.dynamic_rotate %43 by %c2_i32_8 dim 1 : vector<8x128xf32>, i32 -> vector<8x128xf32>
    %cst_9 = arith.constant 0.000000e+00 : f32
    %45 = vector.broadcast %cst_9 : f32 to vector<8x128xf32>
    %46 = arith.select %17, %44, %45 : vector<8x128xi1>, vector<8x128xf32>
    %47 = arith.addf %43, %46 : vector<8x128xf32>
    %c4_i32_10 = arith.constant 4 : i32
    %48 = tpu.dynamic_rotate %47 by %c4_i32_10 dim 1 : vector<8x128xf32>, i32 -> vector<8x128xf32>
    %cst_11 = arith.constant 0.000000e+00 : f32
    %49 = vector.broadcast %cst_11 : f32 to vector<8x128xf32>
    %50 = arith.select %19, %48, %49 : vector<8x128xi1>, vector<8x128xf32>
    %51 = arith.addf %47, %50 : vector<8x128xf32>
    %c8_i32_12 = arith.constant 8 : i32
    %52 = tpu.dynamic_rotate %51 by %c8_i32_12 dim 1 : vector<8x128xf32>, i32 -> vector<8x128xf32>
    %cst_13 = arith.constant 0.000000e+00 : f32
    %53 = vector.broadcast %cst_13 : f32 to vector<8x128xf32>
    %54 = arith.select %21, %52, %53 : vector<8x128xi1>, vector<8x128xf32>
    %55 = arith.addf %51, %54 : vector<8x128xf32>
    %c127_i32_14 = arith.constant 127 : i32
    %56 = tpu.dynamic_rotate %55 by %c127_i32_14 dim 1 : vector<8x128xf32>, i32 -> vector<8x128xf32>
    %57 = arith.maximumf %55, %56 : vector<8x128xf32>
    %58 = arith.select %7, %57, %55 : vector<8x128xi1>, vector<8x128xf32>
    %c126_i32_15 = arith.constant 126 : i32
    %59 = tpu.dynamic_rotate %58 by %c126_i32_15 dim 1 : vector<8x128xf32>, i32 -> vector<8x128xf32>
    %60 = arith.maximumf %58, %59 : vector<8x128xf32>
    %61 = arith.select %9, %60, %58 : vector<8x128xi1>, vector<8x128xf32>
    %c124_i32_16 = arith.constant 124 : i32
    %62 = tpu.dynamic_rotate %61 by %c124_i32_16 dim 1 : vector<8x128xf32>, i32 -> vector<8x128xf32>
    %63 = arith.maximumf %61, %62 : vector<8x128xf32>
    %64 = arith.select %11, %63, %61 : vector<8x128xi1>, vector<8x128xf32>
    %c120_i32_17 = arith.constant 120 : i32
    %65 = tpu.dynamic_rotate %64 by %c120_i32_17 dim 1 : vector<8x128xf32>, i32 -> vector<8x128xf32>
    %66 = arith.maximumf %64, %65 : vector<8x128xf32>
    %67 = arith.select %13, %66, %64 : vector<8x128xi1>, vector<8x128xf32>
    %68 = tpu.reciprocal %67 {approx = true} : vector<8x128xf32> -> vector<8x128xf32>
    %69 = arith.mulf %67, %68 : vector<8x128xf32>
    %cst_18 = arith.constant 2.000000e+00 : f32
    %70 = vector.broadcast %cst_18 : f32 to vector<8x128xf32>
    %71 = arith.subf %70, %69 : vector<8x128xf32>
    %72 = arith.mulf %68, %71 : vector<8x128xf32>
    %73 = arith.mulf %39, %72 : vector<8x128xf32>
    %c0_19 = arith.constant 0 : index
    %c0_20 = arith.constant 0 : index
    %74 = vector.load %arg6[%c0_19, %c0_20] : memref<8x128xf32, #tpu.memory_space<vmem>>, vector<8x128xf32>
    tpu.vector_store %arg6[%c0_19, %c0_20], %73 {strides = array<i32>} : memref<8x128xf32, #tpu.memory_space<vmem>>, vector<8x128xf32>,
    %c0_21 = arith.constant 0 : index
    %c0_22 = arith.constant 0 : index
    %75 = vector.load %arg2[%c0_21, %c0_22] : memref<8x8xf32, #tpu.memory_space<vmem>>, vector<8x8xf32>
    %c0_23 = arith.constant 0 : index
    %c0_24 = arith.constant 0 : index
    %76 = vector.load %arg3[%c0_23, %c0_24] : memref<8x128xf32, #tpu.memory_space<vmem>>, vector<8x128xf32>
    %cst_25 = arith.constant dense<0.000000e+00> : vector<8x128xf32>
    %77 = tpu.matmul %75, %76, %cst_25 {dimension_numbers = #tpu.dot_dimension_numbers<[1], [0], [0], [1], [0, 0, 1, 1], [], []>, precision = #tpu.contract_precision<fp32>} : vector<8x8xf32>, vector<8x128xf32>, vector<8x128xf32> -> vector<8x128xf32>
    %78 = arith.mulf %77, %67 : vector<8x128xf32>
    %79 = arith.cmpf olt, %55, %78 : vector<8x128xf32>
    %80 = arith.extui %79 : vector<8x128xi1> to vector<8x128xi32>
    %81 = arith.sitofp %80 : vector<8x128xi32> to vector<8x128xf32>
    %82 = arith.truncf %81 : vector<8x128xf32> to vector<8x128xbf16>
    %c0_26 = arith.constant 0 : index
    %c0_27 = arith.constant 0 : index
    %83 = vector.load %arg4[%c0_26, %c0_27] : memref<128x8xbf16, #tpu.memory_space<vmem>>, vector<128x8xbf16>
    %cst_28 = arith.constant dense<0.000000e+00> : vector<8x8xf32>
    %84 = tpu.matmul %82, %83, %cst_28 {dimension_numbers = #tpu.dot_dimension_numbers<[1], [0], [0], [1], [0, 0, 1, 1], [], []>} : vector<8x128xbf16>, vector<128x8xbf16>, vector<8x8xf32> -> vector<8x8xf32>
    %85 = arith.fptosi %84 : vector<8x8xf32> to vector<8x8xi32>
    %c15_i32_29 = arith.constant 15 : i32
    %86 = vector.broadcast %c15_i32_29 : i32 to vector<8x8xi32>
    %87 = arith.minsi %85, %86 : vector<8x8xi32>
    %c0_30 = arith.constant 0 : index
    %c0_31 = arith.constant 0 : index
    %88 = vector.load %arg5[%c0_30, %c0_31] : memref<8x8xi32, #tpu.memory_space<vmem>>, vector<8x8xi32>
    tpu.vector_store %arg5[%c0_30, %c0_31], %87 {strides = array<i32>} : memref<8x8xi32, #tpu.memory_space<vmem>>, vector<8x8xi32>,
    return
  }
  func.func @transform_0(%arg0: i32) -> (i32, i32) {
    %c0_i32 = arith.constant 0 : i32
    %c0_i32_0 = arith.constant 0 : i32
    return %arg0, %c0_i32 : i32, i32
  }
  func.func @transform_1(%arg0: i32) -> (i32, i32) {
    %c0_i32 = arith.constant 0 : i32
    %c0_i32_0 = arith.constant 0 : i32
    return %arg0, %c0_i32 : i32, i32
  }
  func.func @transform_2(%arg0: i32) -> (i32, i32) {
    %c0_i32 = arith.constant 0 : i32
    %c0_i32_0 = arith.constant 0 : i32
    %c0_i32_1 = arith.constant 0 : i32
    return %c0_i32, %c0_i32_0 : i32, i32
  }
  func.func @transform_3(%arg0: i32) -> (i32, i32) {
    %c0_i32 = arith.constant 0 : i32
    %c0_i32_0 = arith.constant 0 : i32
    %c0_i32_1 = arith.constant 0 : i32
    return %c0_i32, %c0_i32_0 : i32, i32
  }
  func.func @transform_4(%arg0: i32) -> (i32, i32) {
    %c0_i32 = arith.constant 0 : i32
    %c0_i32_0 = arith.constant 0 : i32
    return %arg0, %c0_i32 : i32, i32
  }
  func.func @transform_5(%arg0: i32) -> (i32, i32) {
    %c0_i32 = arith.constant 0 : i32
    %c0_i32_0 = arith.constant 0 : i32
    return %arg0, %c0_i32 : i32, i32
  }
}

</mosaic_0001>

<llo_original>
// kernel: tpu_custom_call.1
$region0: #{tpu_custom_call.1}
  #allocation0 [shape = 'u32[]', space=smem, size = 0x4, offset = 0x4, fixed_abs, tag = 'smem constant byte address 0x4 - core index']
  #allocation1 [shape = 'u32[144,128]{1,0:T(1,128)}', space=vmem, size = 0x12000, scoped, tag = 'internal scratch']
  %s0 = inlined_call_operand.vmem [shape: f32[8,128], index: 0, kind: input, shape index: {}]
  %s1 = inlined_call_operand.vmem [shape: f32[8,8], index: 1, kind: input, shape index: {}]
  %s2 = inlined_call_operand.vmem [shape: f32[8,128], index: 2, kind: input, shape index: {}]
  %s3 = inlined_call_operand.vmem [shape: bf16[128,8], index: 3, kind: input, shape index: {}]
  %s4 = inlined_call_operand.hbm [shape: s32[8,8], index: 4, kind: output, shape index: {0}]
  %s5 = inlined_call_operand.hbm [shape: f32[8,128], index: 5, kind: output, shape index: {1}]
  %6 = xla_tuple %s4, %s5
  %s7 = sld [smem:[#allocation0]]
  $region34: #{tpu_custom_call.1} parent=0
    _
  %s9 = ssub.s32 1, %s7
  %s10 = scalar_select 0, %s9, %s7
  $region1: #{tpu_custom_call.1} parent=0
    #allocation2 [shape = 'u8[4096]{0}', space=vmem, size = 0x1000, scoped, tag = 'output window, operand 0, single buffered']
    #allocation3 [shape = 's32[1]{0}', space=sflag, size = 0x4, scoped, tag = 'scoped memory for tpu_custom_call.1']
    #allocation4 [shape = 'u8[4096]{0}', space=vmem, size = 0x1000, scoped, tag = 'output window, operand 1, single buffered']
    #allocation5 [shape = 's32[1]{0}', space=sflag, size = 0x4, scoped, tag = 'scoped memory for tpu_custom_call.1']
    %11 = vsyncpa [#allocation3], 0
    %12 = vsyncpa [#allocation5], 0
    // Predicated region
    $region2: #{tpu_custom_call.1} parent=1 // pred_check
      _
    $region3: #{tpu_custom_call.1} parent=1 // pred_check_branch
      %14 = sbr.rel (0) target = $region5
    $region4: #{tpu_custom_call.1} parent=1 // pred_region
      _
    $region5: #{tpu_custom_call.1} parent=1 // pred_fallthru
      _
    // Predicated region
    $region6: #{tpu_custom_call.1} parent=1 // pred_check
      _
    $region7: #{tpu_custom_call.1} parent=1 // pred_check_branch
      %16 = sbr.rel (0) target = $region9
    $region8: #{tpu_custom_call.1} parent=1 // pred_region
      _
    $region9: #{tpu_custom_call.1} parent=1 // pred_fallthru
      _
    // Predicated region
    $region10: #{tpu_custom_call.1} parent=1 // pred_check
      _
    $region11: #{tpu_custom_call.1} parent=1 // pred_check_branch
      %18 = sbr.rel (0) target = $region13
    $region12: #{tpu_custom_call.1} parent=1 // pred_region
      _
    $region13: #{tpu_custom_call.1} parent=1 // pred_fallthru
      _
    // Predicated region
    $region14: #{tpu_custom_call.1} parent=1 // pred_check
      _
    $region15: #{tpu_custom_call.1} parent=1 // pred_check_branch
      %20 = sbr.rel (0) target = $region17
    $region16: #{tpu_custom_call.1} parent=1 // pred_region
      _
    $region17: #{tpu_custom_call.1} parent=1 // pred_fallthru
      _
    %v22 = vld [vmem:[%s0] sm:$0xff]
    %v23 = vmul.f32 %v22, 100.0
    %v24 = vlaneseq
    %v25 = vand.u32 %v24, 127
    %v26 = vand.u32 %v25, 15
    %vm27 = vcmp.lt.s32.totalorder %v26, 15
    %vm28 = vcmp.lt.s32.totalorder %v26, 14
    %vm29 = vcmp.lt.s32.totalorder %v26, 12
    %vm30 = vcmp.lt.s32.totalorder %v26, 8
    %vm31 = vcmp.ge.s32.totalorder %v26, 1
    %vm32 = vcmp.ge.s32.totalorder %v26, 2
    %vm33 = vcmp.ge.s32.totalorder %v26, 4
    %vm34 = vcmp.ge.s32.totalorder %v26, 8
    %35 = vrot.lane.b32.xlu0 %v23, 127
    %v36 = vpop.permute.xlu0 %35
    %37 = vrot.lane.b32.xlu0 %v36, 16
    %v38 = vpop.permute.xlu0 %37
    %v39 = vsel %vm27, %v36, %v38
    %v40 = vmax.f32 %v23, %v39
    %41 = vrot.lane.b32.xlu0 %v40, 126
    %v42 = vpop.permute.xlu0 %41
    %43 = vrot.lane.b32.xlu0 %v42, 16
    %v44 = vpop.permute.xlu0 %43
    %v45 = vsel %vm28, %v42, %v44
    %v46 = vmax.f32 %v40, %v45
    %47 = vrot.lane.b32.xlu0 %v46, 124
    %v48 = vpop.permute.xlu0 %47
    %49 = vrot.lane.b32.xlu0 %v48, 16
    %v50 = vpop.permute.xlu0 %49
    %v51 = vsel %vm29, %v48, %v50
    %v52 = vmax.f32 %v46, %v51
    %53 = vrot.lane.b32.xlu0 %v52, 120
    %v54 = vpop.permute.xlu0 %53
    %55 = vrot.lane.b32.xlu0 %v54, 16
    %v56 = vpop.permute.xlu0 %55
    %v57 = vsel %vm30, %v54, %v56
    %v58 = vmax.f32 %v52, %v57
    %v59 = vsub.f32 %v23, %v58
    %v60 = vmul.f32 %v59, 1.442695
    %v61 = vpow.pop %v60
    %62 = vrot.lane.b32.xlu0 %v61, 1
    %v63 = vpop.permute.xlu0 %62
    %v64 = vsel %vm31, %v63, 0.0
    %v65 = vadd.f32 %v61, %v64
    %66 = vrot.lane.b32.xlu0 %v65, 2
    %v67 = vpop.permute.xlu0 %66
    %v68 = vsel %vm32, %v67, 0.0
    %v69 = vadd.f32 %v65, %v68
    %70 = vrot.lane.b32.xlu0 %v69, 4
    %v71 = vpop.permute.xlu0 %70
    %v72 = vsel %vm33, %v71, 0.0
    %v73 = vadd.f32 %v69, %v72
    %74 = vrot.lane.b32.xlu0 %v73, 8
    %v75 = vpop.permute.xlu0 %74
    %v76 = vsel %vm34, %v75, 0.0
    %v77 = vadd.f32 %v73, %v76
    %78 = vrot.lane.b32.xlu0 %v77, 127
    %v79 = vpop.permute.xlu0 %78
    %v80 = vmax.f32 %v77, %v79
    %v81 = vsel %vm27, %v80, %v77
    %82 = vrot.lane.b32.xlu0 %v81, 126
    %v83 = vpop.permute.xlu0 %82
    %v84 = vmax.f32 %v81, %v83
    %v85 = vsel %vm28, %v84, %v81
    %86 = vrot.lane.b32.xlu0 %v85, 124
    %v87 = vpop.permute.xlu0 %86
    %v88 = vmax.f32 %v85, %v87
    %v89 = vsel %vm29, %v88, %v85
    %90 = vrot.lane.b32.xlu0 %v89, 120
    %v91 = vpop.permute.xlu0 %90
    %v92 = vmax.f32 %v89, %v91
    %v93 = vsel %vm30, %v92, %v89
    %v94 = vrcp.pop %v93
    %v95 = vmul.f32 %v93, %v94
    %v96 = vsub.f32 2.0, %v95
    %v97 = vmul.f32 %v94, %v96
    %v98 = vmul.f32 %v61, %v97
    %99 = vst [vmem:[#allocation4] sm:$0xff] %v98
    %v100 = vld [vmem:[%s1] sm:$0xff]
    %v101 = vld [vmem:[%s2] sm:$0xff]
    %vm102 = vcmask 64512
    %v104 = vsel %vm102, %v100, 0
    %106 = vmatprep.subr.mxu0 0.0
    %v107 = vand.u32 %v101, 4294901760
    %108 = vmatpush1.msra.mxu0 %v107
    %109 = vmatprep.subr.mxu0 0.0
    %110 = vmatpush1.msra.mxu0 0.0
    %111 = vmatprep.subr.mxu0 0.0
    %112 = vmatpush1.msra.mxu0 0.0
    %113 = vmatprep.subr.mxu0 0.0
    %114 = vmatpush1.msra.mxu0 0.0
    %115 = vmatprep.subr.mxu0 0.0
    %116 = vmatpush1.msra.mxu0 0.0
    %117 = vmatprep.subr.mxu0 0.0
    %118 = vmatpush1.msra.mxu0 0.0
    %119 = vmatprep.subr.mxu0 0.0
    %120 = vmatpush1.msra.mxu0 0.0
    %121 = vmatprep.subr.mxu0 0.0
    %122 = vmatpush1.msra.mxu0 0.0
    %123 = vmatprep.subr.mxu0 0.0
    %124 = vmatpush1.msra.mxu0 0.0
    %125 = vmatprep.subr.mxu0 0.0
    %126 = vmatpush1.msra.mxu0 0.0
    %127 = vmatprep.subr.mxu0 0.0
    %128 = vmatpush1.msra.mxu0 0.0
    %129 = vmatprep.subr.mxu0 0.0
    %130 = vmatpush1.msra.mxu0 0.0
    %131 = vmatprep.subr.mxu0 0.0
    %132 = vmatpush1.msra.mxu0 0.0
    %133 = vmatprep.subr.mxu0 0.0
    %134 = vmatpush1.msra.mxu0 0.0
    %135 = vmatprep.subr.mxu0 0.0
    %136 = vmatpush1.msra.mxu0 0.0
    %137 = vmatprep.subr.mxu0 0.0
    %138 = vmatpush1.msra.mxu0 0.0
    %139 = vmatprep.subr.mxu0 0.0
    %140 = vmatpush1.msra.mxu0 0.0
    %141 = vmatprep.subr.mxu0 0.0
    %142 = vmatpush1.msra.mxu0 0.0
    %143 = vmatprep.subr.mxu0 0.0
    %144 = vmatpush1.msra.mxu0 0.0
    %145 = vmatprep.subr.mxu0 0.0
    %146 = vmatpush1.msra.mxu0 0.0
    %147 = vmatprep.subr.mxu0 0.0
    %148 = vmatpush1.msra.mxu0 0.0
    %149 = vmatprep.subr.mxu0 0.0
    %150 = vmatpush1.msra.mxu0 0.0
    %151 = vmatprep.subr.mxu0 0.0
    %152 = vmatpush1.msra.mxu0 0.0
    %153 = vmatprep.subr.mxu0 0.0
    %154 = vmatpush1.msra.mxu0 0.0
    %155 = vmatprep.subr.mxu0 0.0
    %156 = vmatpush1.msra.mxu0 0.0
    %157 = vmatprep.subr.mxu0 0.0
    %158 = vmatpush1.msra.mxu0 0.0
    %159 = vmatprep.subr.mxu0 0.0
    %160 = vmatpush1.msra.mxu0 0.0
    %161 = vmatprep.subr.mxu0 0.0
    %162 = vmatpush1.msra.mxu0 0.0
    %163 = vmatprep.subr.mxu0 0.0
    %164 = vmatpush1.msra.mxu0 0.0
    %165 = vmatprep.subr.mxu0 0.0
    %166 = vmatpush1.msra.mxu0 0.0
    %167 = vmatprep.subr.mxu0 0.0
    %168 = vmatpush1.msra.mxu0 0.0
    %169 = vmatprep.subr.mxu0 0.0
    %170 = vmatpush1.msra.mxu0 0.0
    %171 = vmatprep.mubr.f32.mxu0 0.0
    %v172 = vand.u32 %v104, 4294901760
    %v173 = vsub.f32 %v104, %v172
    %v174 = vand.u32 %v173, 4294901760
    %v175 = vsub.f32 %v173, %v174
    %v176 = vand.u32 %v175, 4294901760
    %177 = vmatmul.mubr.f32.gmra.mrb[0].mxu0 %v176
    %v178 = vpop.f32.mrb[0].mxu0
    %v179 = vadd.f32 0.0, %v178
    %v180 = vpop.f32.mrb[0].mxu0
    %181 = vdwg.mxu0
    %182 = vmatprep.subr.mxu0 0.0
    %v183 = vand.u32 %v101, 4294901760
    %v184 = vsub.f32 %v101, %v183
    %v185 = vand.u32 %v184, 4294901760
    %v186 = vsub.f32 %v184, %v185
    %v187 = vand.u32 %v186, 4294901760
    %188 = vmatpush1.msra.mxu0 %v187
    %189 = vmatprep.subr.mxu0 0.0
    %190 = vmatpush1.msra.mxu0 0.0
    %191 = vmatprep.subr.mxu0 0.0
    %192 = vmatpush1.msra.mxu0 0.0
    %193 = vmatprep.subr.mxu0 0.0
    %194 = vmatpush1.msra.mxu0 0.0
    %195 = vmatprep.subr.mxu0 0.0
    %196 = vmatpush1.msra.mxu0 0.0
    %197 = vmatprep.subr.mxu0 0.0
    %198 = vmatpush1.msra.mxu0 0.0
    %199 = vmatprep.subr.mxu0 0.0
    %200 = vmatpush1.msra.mxu0 0.0
    %201 = vmatprep.subr.mxu0 0.0
    %202 = vmatpush1.msra.mxu0 0.0
    %203 = vmatprep.subr.mxu0 0.0
    %204 = vmatpush1.msra.mxu0 0.0
    %205 = vmatprep.subr.mxu0 0.0
    %206 = vmatpush1.msra.mxu0 0.0
    %207 = vmatprep.subr.mxu0 0.0
    %208 = vmatpush1.msra.mxu0 0.0
    %209 = vmatprep.subr.mxu0 0.0
    %210 = vmatpush1.msra.mxu0 0.0
    %211 = vmatprep.subr.mxu0 0.0
    %212 = vmatpush1.msra.mxu0 0.0
    %213 = vmatprep.subr.mxu0 0.0
    %214 = vmatpush1.msra.mxu0 0.0
    %215 = vmatprep.subr.mxu0 0.0
    %216 = vmatpush1.msra.mxu0 0.0
    %217 = vmatprep.subr.mxu0 0.0
    %218 = vmatpush1.msra.mxu0 0.0
    %219 = vmatprep.subr.mxu0 0.0
    %220 = vmatpush1.msra.mxu0 0.0
    %221 = vmatprep.subr.mxu0 0.0
    %222 = vmatpush1.msra.mxu0 0.0
    %223 = vmatprep.subr.mxu0 0.0
    %224 = vmatpush1.msra.mxu0 0.0
    %225 = vmatprep.subr.mxu0 0.0
    %226 = vmatpush1.msra.mxu0 0.0
    %227 = vmatprep.subr.mxu0 0.0
    %228 = vmatpush1.msra.mxu0 0.0
    %229 = vmatprep.subr.mxu0 0.0
    %230 = vmatpush1.msra.mxu0 0.0
    %231 = vmatprep.subr.mxu0 0.0
    %232 = vmatpush1.msra.mxu0 0.0
    %233 = vmatprep.subr.mxu0 0.0
    %234 = vmatpush1.msra.mxu0 0.0
    %235 = vmatprep.subr.mxu0 0.0
    %236 = vmatpush1.msra.mxu0 0.0
    %237 = vmatprep.subr.mxu0 0.0
    %238 = vmatpush1.msra.mxu0 0.0
    %239 = vmatprep.subr.mxu0 0.0
    %240 = vmatpush1.msra.mxu0 0.0
    %241 = vmatprep.subr.mxu0 0.0
    %242 = vmatpush1.msra.mxu0 0.0
    %243 = vmatprep.subr.mxu0 0.0
    %244 = vmatpush1.msra.mxu0 0.0
    %245 = vmatprep.subr.mxu0 0.0
    %246 = vmatpush1.msra.mxu0 0.0
    %247 = vmatprep.subr.mxu0 0.0
    %248 = vmatpush1.msra.mxu0 0.0
    %249 = vmatprep.subr.mxu0 0.0
    %250 = vmatpush1.msra.mxu0 0.0
    %251 = vmatprep.mubr.f32.mxu0 0.0
    %v252 = vand.u32 %v104, 4294901760
    %253 = vmatmul.mubr.f32.gmra.mrb[0].mxu0 %v252
    %v254 = vpop.f32.mrb[0].mxu0
    %v255 = vadd.f32 %v179, %v254
    %v256 = vpop.f32.mrb[0].mxu0
    %257 = vdwg.mxu0
    %258 = vmatprep.subr.mxu0 0.0
    %v259 = vand.u32 %v101, 4294901760
    %v260 = vsub.f32 %v101, %v259
    %261 = vmatpush1.msra.mxu0 %v260
    %262 = vmatprep.subr.mxu0 0.0
    %263 = vmatpush1.msra.mxu0 0.0
    %264 = vmatprep.subr.mxu0 0.0
    %265 = vmatpush1.msra.mxu0 0.0
    %266 = vmatprep.subr.mxu0 0.0
    %267 = vmatpush1.msra.mxu0 0.0
    %268 = vmatprep.subr.mxu0 0.0
    %269 = vmatpush1.msra.mxu0 0.0
    %270 = vmatprep.subr.mxu0 0.0
    %271 = vmatpush1.msra.mxu0 0.0
    %272 = vmatprep.subr.mxu0 0.0
    %273 = vmatpush1.msra.mxu0 0.0
    %274 = vmatprep.subr.mxu0 0.0
    %275 = vmatpush1.msra.mxu0 0.0
    %276 = vmatprep.subr.mxu0 0.0
    %277 = vmatpush1.msra.mxu0 0.0
    %278 = vmatprep.subr.mxu0 0.0
    %279 = vmatpush1.msra.mxu0 0.0
    %280 = vmatprep.subr.mxu0 0.0
    %281 = vmatpush1.msra.mxu0 0.0
    %282 = vmatprep.subr.mxu0 0.0
    %283 = vmatpush1.msra.mxu0 0.0
    %284 = vmatprep.subr.mxu0 0.0
    %285 = vmatpush1.msra.mxu0 0.0
    %286 = vmatprep.subr.mxu0 0.0
    %287 = vmatpush1.msra.mxu0 0.0
    %288 = vmatprep.subr.mxu0 0.0
    %289 = vmatpush1.msra.mxu0 0.0
    %290 = vmatprep.subr.mxu0 0.0
    %291 = vmatpush1.msra.mxu0 0.0
    %292 = vmatprep.subr.mxu0 0.0
    %293 = vmatpush1.msra.mxu0 0.0
    %294 = vmatprep.subr.mxu0 0.0
    %295 = vmatpush1.msra.mxu0 0.0
    %296 = vmatprep.subr.mxu0 0.0
    %297 = vmatpush1.msra.mxu0 0.0
    %298 = vmatprep.subr.mxu0 0.0
    %299 = vmatpush1.msra.mxu0 0.0
    %300 = vmatprep.subr.mxu0 0.0
    %301 = vmatpush1.msra.mxu0 0.0
    %302 = vmatprep.subr.mxu0 0.0
    %303 = vmatpush1.msra.mxu0 0.0
    %304 = vmatprep.subr.mxu0 0.0
    %305 = vmatpush1.msra.mxu0 0.0
    %306 = vmatprep.subr.mxu0 0.0
    %307 = vmatpush1.msra.mxu0 0.0
    %308 = vmatprep.subr.mxu0 0.0
    %309 = vmatpush1.msra.mxu0 0.0
    %310 = vmatprep.subr.mxu0 0.0
    %311 = vmatpush1.msra.mxu0 0.0
    %312 = vmatprep.subr.mxu0 0.0
    %313 = vmatpush1.msra.mxu0 0.0
    %314 = vmatprep.subr.mxu0 0.0
    %315 = vmatpush1.msra.mxu0 0.0
    %316 = vmatprep.subr.mxu0 0.0
    %317 = vmatpush1.msra.mxu0 0.0
    %318 = vmatprep.subr.mxu0 0.0
    %319 = vmatpush1.msra.mxu0 0.0
    %320 = vmatprep.subr.mxu0 0.0
    %321 = vmatpush1.msra.mxu0 0.0
    %322 = vmatprep.subr.mxu0 0.0
    %323 = vmatpush1.msra.mxu0 0.0
    %324 = vmatprep.mubr.f32.mxu0 0.0
    %v325 = vand.u32 %v104, 4294901760
    %v326 = vsub.f32 %v104, %v325
    %327 = vmatmul.mubr.f32.gmra.mrb[0].mxu0 %v326
    %v328 = vpop.f32.mrb[0].mxu0
    %v329 = vadd.f32 %v255, %v328
    %v330 = vpop.f32.mrb[0].mxu0
    %331 = vdwg.mxu0
    %332 = vmatprep.subr.mxu0 0.0
    %v333 = vand.u32 %v101, 4294901760
    %334 = vmatpush1.msra.mxu0 %v333
    %335 = vmatprep.subr.mxu0 0.0
    %336 = vmatpush1.msra.mxu0 0.0
    %337 = vmatprep.subr.mxu0 0.0
    %338 = vmatpush1.msra.mxu0 0.0
    %339 = vmatprep.subr.mxu0 0.0
    %340 = vmatpush1.msra.mxu0 0.0
    %341 = vmatprep.subr.mxu0 0.0
    %342 = vmatpush1.msra.mxu0 0.0
    %343 = vmatprep.subr.mxu0 0.0
    %344 = vmatpush1.msra.mxu0 0.0
    %345 = vmatprep.subr.mxu0 0.0
    %346 = vmatpush1.msra.mxu0 0.0
    %347 = vmatprep.subr.mxu0 0.0
    %348 = vmatpush1.msra.mxu0 0.0
    %349 = vmatprep.subr.mxu0 0.0
    %350 = vmatpush1.msra.mxu0 0.0
    %351 = vmatprep.subr.mxu0 0.0
    %352 = vmatpush1.msra.mxu0 0.0
    %353 = vmatprep.subr.mxu0 0.0
    %354 = vmatpush1.msra.mxu0 0.0
    %355 = vmatprep.subr.mxu0 0.0
    %356 = vmatpush1.msra.mxu0 0.0
    %357 = vmatprep.subr.mxu0 0.0
    %358 = vmatpush1.msra.mxu0 0.0
    %359 = vmatprep.subr.mxu0 0.0
    %360 = vmatpush1.msra.mxu0 0.0
    %361 = vmatprep.subr.mxu0 0.0
    %362 = vmatpush1.msra.mxu0 0.0
    %363 = vmatprep.subr.mxu0 0.0
    %364 = vmatpush1.msra.mxu0 0.0
    %365 = vmatprep.subr.mxu0 0.0
    %366 = vmatpush1.msra.mxu0 0.0
    %367 = vmatprep.subr.mxu0 0.0
    %368 = vmatpush1.msra.mxu0 0.0
    %369 = vmatprep.subr.mxu0 0.0
    %370 = vmatpush1.msra.mxu0 0.0
    %371 = vmatprep.subr.mxu0 0.0
    %372 = vmatpush1.msra.mxu0 0.0
    %373 = vmatprep.subr.mxu0 0.0
    %374 = vmatpush1.msra.mxu0 0.0
    %375 = vmatprep.subr.mxu0 0.0
    %376 = vmatpush1.msra.mxu0 0.0
    %377 = vmatprep.subr.mxu0 0.0
    %378 = vmatpush1.msra.mxu0 0.0
    %379 = vmatprep.subr.mxu0 0.0
    %380 = vmatpush1.msra.mxu0 0.0
    %381 = vmatprep.subr.mxu0 0.0
    %382 = vmatpush1.msra.mxu0 0.0
    %383 = vmatprep.subr.mxu0 0.0
    %384 = vmatpush1.msra.mxu0 0.0
    %385 = vmatprep.subr.mxu0 0.0
    %386 = vmatpush1.msra.mxu0 0.0
    %387 = vmatprep.subr.mxu0 0.0
    %388 = vmatpush1.msra.mxu0 0.0
    %389 = vmatprep.subr.mxu0 0.0
    %390 = vmatpush1.msra.mxu0 0.0
    %391 = vmatprep.subr.mxu0 0.0
    %392 = vmatpush1.msra.mxu0 0.0
    %393 = vmatprep.subr.mxu0 0.0
    %394 = vmatpush1.msra.mxu0 0.0
    %395 = vmatprep.subr.mxu0 0.0
    %396 = vmatpush1.msra.mxu0 0.0
    %397 = vmatprep.mubr.f32.mxu0 0.0
    %v398 = vand.u32 %v104, 4294901760
    %v399 = vsub.f32 %v104, %v398
    %v400 = vand.u32 %v399, 4294901760
    %401 = vmatmul.mubr.f32.gmra.mrb[0].mxu0 %v400
    %v402 = vpop.f32.mrb[0].mxu0
    %v403 = vadd.f32 %v329, %v402
    %v404 = vpop.f32.mrb[0].mxu0
    %405 = vdwg.mxu0
    %406 = vmatprep.subr.mxu0 0.0
    %v407 = vand.u32 %v101, 4294901760
    %v408 = vsub.f32 %v101, %v407
    %v409 = vand.u32 %v408, 4294901760
    %410 = vmatpush1.msra.mxu0 %v409
    %411 = vmatprep.subr.mxu0 0.0
    %412 = vmatpush1.msra.mxu0 0.0
    %413 = vmatprep.subr.mxu0 0.0
    %414 = vmatpush1.msra.mxu0 0.0
    %415 = vmatprep.subr.mxu0 0.0
    %416 = vmatpush1.msra.mxu0 0.0
    %417 = vmatprep.subr.mxu0 0.0
    %418 = vmatpush1.msra.mxu0 0.0
    %419 = vmatprep.subr.mxu0 0.0
    %420 = vmatpush1.msra.mxu0 0.0
    %421 = vmatprep.subr.mxu0 0.0
    %422 = vmatpush1.msra.mxu0 0.0
    %423 = vmatprep.subr.mxu0 0.0
    %424 = vmatpush1.msra.mxu0 0.0
    %425 = vmatprep.subr.mxu0 0.0
    %426 = vmatpush1.msra.mxu0 0.0
    %427 = vmatprep.subr.mxu0 0.0
    %428 = vmatpush1.msra.mxu0 0.0
    %429 = vmatprep.subr.mxu0 0.0
    %430 = vmatpush1.msra.mxu0 0.0
    %431 = vmatprep.subr.mxu0 0.0
    %432 = vmatpush1.msra.mxu0 0.0
    %433 = vmatprep.subr.mxu0 0.0
    %434 = vmatpush1.msra.mxu0 0.0
    %435 = vmatprep.subr.mxu0 0.0
    %436 = vmatpush1.msra.mxu0 0.0
    %437 = vmatprep.subr.mxu0 0.0
    %438 = vmatpush1.msra.mxu0 0.0
    %439 = vmatprep.subr.mxu0 0.0
    %440 = vmatpush1.msra.mxu0 0.0
    %441 = vmatprep.subr.mxu0 0.0
    %442 = vmatpush1.msra.mxu0 0.0
    %443 = vmatprep.subr.mxu0 0.0
    %444 = vmatpush1.msra.mxu0 0.0
    %445 = vmatprep.subr.mxu0 0.0
    %446 = vmatpush1.msra.mxu0 0.0
    %447 = vmatprep.subr.mxu0 0.0
    %448 = vmatpush1.msra.mxu0 0.0
    %449 = vmatprep.subr.mxu0 0.0
    %450 = vmatpush1.msra.mxu0 0.0
    %451 = vmatprep.subr.mxu0 0.0
    %452 = vmatpush1.msra.mxu0 0.0
    %453 = vmatprep.subr.mxu0 0.0
    %454 = vmatpush1.msra.mxu0 0.0
    %455 = vmatprep.subr.mxu0 0.0
    %456 = vmatpush1.msra.mxu0 0.0
    %457 = vmatprep.subr.mxu0 0.0
    %458 = vmatpush1.msra.mxu0 0.0
    %459 = vmatprep.subr.mxu0 0.0
    %460 = vmatpush1.msra.mxu0 0.0
    %461 = vmatprep.subr.mxu0 0.0
    %462 = vmatpush1.msra.mxu0 0.0
    %463 = vmatprep.subr.mxu0 0.0
    %464 = vmatpush1.msra.mxu0 0.0
    %465 = vmatprep.subr.mxu0 0.0
    %466 = vmatpush1.msra.mxu0 0.0
    %467 = vmatprep.subr.mxu0 0.0
    %468 = vmatpush1.msra.mxu0 0.0
    %469 = vmatprep.subr.mxu0 0.0
    %470 = vmatpush1.msra.mxu0 0.0
    %471 = vmatprep.subr.mxu0 0.0
    %472 = vmatpush1.msra.mxu0 0.0
    %473 = vmatprep.mubr.f32.mxu0 0.0
    %v474 = vand.u32 %v104, 4294901760
    %475 = vmatmul.mubr.f32.gmra.mrb[0].mxu0 %v474
    %v476 = vpop.f32.mrb[0].mxu0
    %v477 = vadd.f32 %v403, %v476
    %v478 = vpop.f32.mrb[0].mxu0
    %479 = vdwg.mxu0
    %480 = vmatprep.subr.mxu0 0.0
    %v481 = vand.u32 %v101, 4294901760
    %482 = vmatpush1.msra.mxu0 %v481
    %483 = vmatprep.subr.mxu0 0.0
    %484 = vmatpush1.msra.mxu0 0.0
    %485 = vmatprep.subr.mxu0 0.0
    %486 = vmatpush1.msra.mxu0 0.0
    %487 = vmatprep.subr.mxu0 0.0
    %488 = vmatpush1.msra.mxu0 0.0
    %489 = vmatprep.subr.mxu0 0.0
    %490 = vmatpush1.msra.mxu0 0.0
    %491 = vmatprep.subr.mxu0 0.0
    %492 = vmatpush1.msra.mxu0 0.0
    %493 = vmatprep.subr.mxu0 0.0
    %494 = vmatpush1.msra.mxu0 0.0
    %495 = vmatprep.subr.mxu0 0.0
    %496 = vmatpush1.msra.mxu0 0.0
    %497 = vmatprep.subr.mxu0 0.0
    %498 = vmatpush1.msra.mxu0 0.0
    %499 = vmatprep.subr.mxu0 0.0
    %500 = vmatpush1.msra.mxu0 0.0
    %501 = vmatprep.subr.mxu0 0.0
    %502 = vmatpush1.msra.mxu0 0.0
    %503 = vmatprep.subr.mxu0 0.0
    %504 = vmatpush1.msra.mxu0 0.0
    %505 = vmatprep.subr.mxu0 0.0
    %506 = vmatpush1.msra.mxu0 0.0
    %507 = vmatprep.subr.mxu0 0.0
    %508 = vmatpush1.msra.mxu0 0.0
    %509 = vmatprep.subr.mxu0 0.0
    %510 = vmatpush1.msra.mxu0 0.0
    %511 = vmatprep.subr.mxu0 0.0
    %512 = vmatpush1.msra.mxu0 0.0
    %513 = vmatprep.subr.mxu0 0.0
    %514 = vmatpush1.msra.mxu0 0.0
    %515 = vmatprep.subr.mxu0 0.0
    %516 = vmatpush1.msra.mxu0 0.0
    %517 = vmatprep.subr.mxu0 0.0
    %518 = vmatpush1.msra.mxu0 0.0
    %519 = vmatprep.subr.mxu0 0.0
    %520 = vmatpush1.msra.mxu0 0.0
    %521 = vmatprep.subr.mxu0 0.0
    %522 = vmatpush1.msra.mxu0 0.0
    %523 = vmatprep.subr.mxu0 0.0
    %524 = vmatpush1.msra.mxu0 0.0
    %525 = vmatprep.subr.mxu0 0.0
    %526 = vmatpush1.msra.mxu0 0.0
    %527 = vmatprep.subr.mxu0 0.0
    %528 = vmatpush1.msra.mxu0 0.0
    %529 = vmatprep.subr.mxu0 0.0
    %530 = vmatpush1.msra.mxu0 0.0
    %531 = vmatprep.subr.mxu0 0.0
    %532 = vmatpush1.msra.mxu0 0.0
    %533 = vmatprep.subr.mxu0 0.0
    %534 = vmatpush1.msra.mxu0 0.0
    %535 = vmatprep.subr.mxu0 0.0
    %536 = vmatpush1.msra.mxu0 0.0
    %537 = vmatprep.subr.mxu0 0.0
    %538 = vmatpush1.msra.mxu0 0.0
    %539 = vmatprep.subr.mxu0 0.0
    %540 = vmatpush1.msra.mxu0 0.0
    %541 = vmatprep.subr.mxu0 0.0
    %542 = vmatpush1.msra.mxu0 0.0
    %543 = vmatprep.subr.mxu0 0.0
    %544 = vmatpush1.msra.mxu0 0.0
    %545 = vmatprep.mubr.f32.mxu0 0.0
    %v546 = vand.u32 %v104, 4294901760
    %547 = vmatmul.mubr.f32.gmra.mrb[0].mxu0 %v546
    %v548 = vpop.f32.mrb[0].mxu0
    %v549 = vadd.f32 %v477, %v548
    %v550 = vpop.f32.mrb[0].mxu0
    %551 = vdwg.mxu0
    %v552 = vmul.f32 %v549, %v93
    %vm553 = vcmp.lt.f32.partialorder %v77, %v552
    %v554 = vsel %vm553, 1, 0
    %v555 = vcvt.s32.f32 %v554
    %v556 = vpack.c.bf16 %v555, %v555
    %v557 = vld [vmem:[%s3] sm:$0xf]
    %v558 = vld [vmem:[%s3 + $0x4] sm:$0xf]
    %v559 = vld [vmem:[%s3 + $0x8] sm:$0xf]
    %v560 = vld [vmem:[%s3 + $0xc] sm:$0xf]
    %v561 = vld [vmem:[%s3 + $0x10] sm:$0xf]
    %v562 = vld [vmem:[%s3 + $0x14] sm:$0xf]
    %v563 = vld [vmem:[%s3 + $0x18] sm:$0xf]
    %v564 = vld [vmem:[%s3 + $0x1c] sm:$0xf]
    %v565 = vld [vmem:[%s3 + $0x20] sm:$0xf]
    %v566 = vld [vmem:[%s3 + $0x24] sm:$0xf]
    %v567 = vld [vmem:[%s3 + $0x28] sm:$0xf]
    %v568 = vld [vmem:[%s3 + $0x2c] sm:$0xf]
    %v569 = vld [vmem:[%s3 + $0x30] sm:$0xf]
    %v570 = vld [vmem:[%s3 + $0x34] sm:$0xf]
    %v571 = vld [vmem:[%s3 + $0x38] sm:$0xf]
    %v572 = vld [vmem:[%s3 + $0x3c] sm:$0xf]
    %v589 = vunpack.c.l.b16 %v557
    %v590 = vunpack.c.l.b16 %v558
    %v591 = vunpack.c.l.b16 %v559
    %v592 = vunpack.c.l.b16 %v560
    %v593 = vunpack.c.l.b16 %v561
    %v594 = vunpack.c.l.b16 %v562
    %v595 = vunpack.c.l.b16 %v563
    %v596 = vunpack.c.l.b16 %v564
    %v597 = vunpack.c.l.b16 %v565
    %v598 = vunpack.c.l.b16 %v566
    %v599 = vunpack.c.l.b16 %v567
    %v600 = vunpack.c.l.b16 %v568
    %v601 = vunpack.c.l.b16 %v569
    %v602 = vunpack.c.l.b16 %v570
    %v603 = vunpack.c.l.b16 %v571
    %v604 = vunpack.c.l.b16 %v572
    %v605 = vpack.c.b16 %v590, %v589
    %v606 = vpack.c.b16 %v592, %v591
    %v607 = vpack.c.b16 %v594, %v593
    %v608 = vpack.c.b16 %v596, %v595
    %v609 = vpack.c.b16 %v598, %v597
    %v610 = vpack.c.b16 %v600, %v599
    %v611 = vpack.c.b16 %v602, %v601
    %v612 = vpack.c.b16 %v604, %v603
    %621 = vmatprep.subr.bf16.mxu0 0
    %622 = vmatpush1.bf16.msra.mxu0 %v605
    %623 = vmatprep.subr.bf16.mxu0 0
    %624 = vmatpush1.bf16.msra.mxu0 %v606
    %625 = vmatprep.subr.bf16.mxu0 0
    %626 = vmatpush1.bf16.msra.mxu0 %v607
    %627 = vmatprep.subr.bf16.mxu0 0
    %628 = vmatpush1.bf16.msra.mxu0 %v608
    %629 = vmatprep.subr.bf16.mxu0 0
    %630 = vmatpush1.bf16.msra.mxu0 %v609
    %631 = vmatprep.subr.bf16.mxu0 0
    %632 = vmatpush1.bf16.msra.mxu0 %v610
    %633 = vmatprep.subr.bf16.mxu0 0
    %634 = vmatpush1.bf16.msra.mxu0 %v611
    %635 = vmatprep.subr.bf16.mxu0 0
    %636 = vmatpush1.bf16.msra.mxu0 %v612
    %637 = vmatprep.subr.bf16.mxu0 0
    %638 = vmatpush1.bf16.msra.mxu0 0
    %639 = vmatprep.subr.bf16.mxu0 0
    %640 = vmatpush1.bf16.msra.mxu0 0
    %641 = vmatprep.subr.bf16.mxu0 0
    %642 = vmatpush1.bf16.msra.mxu0 0
    %643 = vmatprep.subr.bf16.mxu0 0
    %644 = vmatpush1.bf16.msra.mxu0 0
    %645 = vmatprep.subr.bf16.mxu0 0
    %646 = vmatpush1.bf16.msra.mxu0 0
    %647 = vmatprep.subr.bf16.mxu0 0
    %648 = vmatpush1.bf16.msra.mxu0 0
    %649 = vmatprep.subr.bf16.mxu0 0
    %650 = vmatpush1.bf16.msra.mxu0 0
    %651 = vmatprep.subr.bf16.mxu0 0
    %652 = vmatpush1.bf16.msra.mxu0 0
    %653 = vmatprep.mubr.bf16.mxu0 0
    %654 = vmatmul.mubr.bf16.gmra.mrb[0].mxu0 %v556
    %v655 = vpop.f32.mrb[0].mxu0
    %v656 = vadd.f32 0.0, %v655
    %v657 = vpop.f32.mrb[0].mxu0
    %v658 = vpop.f32.mrb[0].mxu0
    %v659 = vpop.f32.mrb[0].mxu0
    %660 = vdwg.mxu0
    %v661 = vcvt.f32.s32.to.zero.pseudo %v656
    %vm662 = vcmp.lt.s32.totalorder %v661, 15
    %v663 = vsel %vm662, %v661, 15
    %664 = vst.msk [vmem:[#allocation2] sm:$0xff] %vm102, %v663
    // Predicated region
    $region18: #{tpu_custom_call.1} parent=1 // pred_check
      _
    $region19: #{tpu_custom_call.1} parent=1 // pred_check_branch
      %666 = sbr.rel (0) target = $region21
    $region20: #{tpu_custom_call.1} parent=1 // pred_region
      %s668 = ssub.s32 128, 128
      %669 = vsyncadd [#allocation3], %s668
      %s671 = sshll.u32 [#allocation2], 4
      %s672 = int_to_ptr.vmem [resolvable:$true] %s671
      %674 = dma.vmem_to_hbm [thread:$0]  %s672, 128, %s4, [#allocation3]
    $region21: #{tpu_custom_call.1} parent=1 // pred_fallthru
      _
    // Predicated region
    $region22: #{tpu_custom_call.1} parent=1 // pred_check
      _
    $region23: #{tpu_custom_call.1} parent=1 // pred_check_branch
      %676 = sbr.rel (0) target = $region25
    $region24: #{tpu_custom_call.1} parent=1 // pred_region
      %s678 = ssub.s32 128, 128
      %679 = vsyncadd [#allocation5], %s678
      %s681 = sshll.u32 [#allocation4], 4
      %s682 = int_to_ptr.vmem [resolvable:$true] %s681
      %684 = dma.vmem_to_hbm [thread:$0]  %s682, 128, %s5, [#allocation5]
    $region25: #{tpu_custom_call.1} parent=1 // pred_fallthru
      _
    // Predicated region
    $region26: #{tpu_custom_call.1} parent=1 // pred_check
      _
    $region27: #{tpu_custom_call.1} parent=1 // pred_check_branch
      %686 = sbr.rel (0) target = $region29
    $region28: #{tpu_custom_call.1} parent=1 // pred_region
      %687 = dma.done [#allocation3], 128
    $region29: #{tpu_custom_call.1} parent=1 // pred_fallthru
      _
    // Predicated region
    $region30: #{tpu_custom_call.1} parent=1 // pred_check
      _
    $region31: #{tpu_custom_call.1} parent=1 // pred_check_branch
      %689 = sbr.rel (0) target = $region33
    $region32: #{tpu_custom_call.1} parent=1 // pred_region
      %690 = dma.done [#allocation5], 128
    $region33: #{tpu_custom_call.1} parent=1 // pred_fallthru
      _
    %691 = vsyncpa [#allocation3], 1
    %692 = vsyncpa [#allocation5], 1

</llo_original>
